<compile_context>
chip_gen: v7x
topology: tpu7x:2x2x1
jax: 0.10.0
libtpu: 0.0.40
codegen_flags: <defaults>
</compile_context>

<pallas_src>
import jax
import jax.numpy as jnp
from jax.experimental import pallas as pl
from jax.experimental.pallas import tpu as pltpu


def _round_up(x, m):
    return ((x + m - 1) // m) * m


def pnetwork_kernel(x_ref, w1_ref, b1_ref, w2_ref, b2_ref, w3_ref, b3_ref,
                    o_ref):
    # x_ref: (TB, 3) bf16 streamed tile; weights/biases are VMEM/SMEM resident.
    x = x_ref[...]
    w1 = w1_ref[...]                                       # (3, 64) f32

    # fc1: K=3 contraction as three broadcast FMAs on the VPU (f32 math).
    h1 = (x[:, 0:1] * w1[0:1, :]
          + x[:, 1:2] * w1[1:2, :]
          + x[:, 2:3] * w1[2:3, :])                        # (TB, 64) f32
    h1 = jnp.maximum(h1 + b1_ref[...], 0.0)

    # fc2: the one real matmul -> MXU, bf16 operands, f32 accumulation.
    h2 = jnp.dot(h1.astype(jnp.bfloat16), w2_ref[...],
                 preferred_element_type=jnp.float32)       # (TB, 64) f32
    h2 = jnp.maximum(h2 + b2_ref[...], 0.0)

    # fc3: N=1 layer as a lane reduction + SMEM scalar bias; tanh on the EUP.
    y = jnp.sum(h2 * w3_ref[...], axis=-1, keepdims=True) + b3_ref[0, 0]
    o_ref[...] = jnp.tanh(y) * 2.0


def pnetwork_forward(state, params):
    """state: (B, 3) float32 -> (B, 1) float32 action in [-2, 2]."""
    w1, b1 = params["w1"], params["b1"]
    w2, b2 = params["w2"], params["b2"]
    w3, b3 = params["w3"], params["b3"]

    B = state.shape[0]
    TB = min(512, _round_up(B, 16))        # batch tile (bf16 sublane aligned)
    B_pad = _round_up(B, TB)
    grid = (B_pad // TB,)

    x = state
    if B_pad != B:
        x = jnp.pad(x, ((0, B_pad - B), (0, 0)))
    x = x.astype(jnp.bfloat16)             # halve HBM bytes of streamed input
    w2_bf16 = w2.astype(jnp.bfloat16)      # bf16-native MXU path on v6e/v7x
    w3_row = w3.reshape(1, 64)             # (64,1) -> (1,64) row for reduce

    resident = lambda i: (0, 0)            # same block every grid step

    out = pl.pallas_call(
        pnetwork_kernel,
        grid=grid,
        in_specs=[
            pl.BlockSpec((TB, 3), lambda i: (i, 0)),            # x (streamed)
            pl.BlockSpec((3, 64), resident),                    # w1
            pl.BlockSpec((1, 64), resident),                    # b1
            pl.BlockSpec((64, 64), resident),                   # w2 (bf16)
            pl.BlockSpec((1, 64), resident),                    # b2
            pl.BlockSpec((1, 64), resident),                    # w3 row
            pl.BlockSpec(memory_space=pltpu.MemorySpace.SMEM),  # b3 scalar
        ],
        out_specs=pl.BlockSpec((TB, 1), lambda i: (i, 0)),
        out_shape=jax.ShapeDtypeStruct((B_pad, 1), jnp.float32),
        compiler_params=pltpu.CompilerParams(
            dimension_semantics=("parallel",)),
    )(x, w1, b1, w2_bf16, b2, w3_row, b3)

    return out[:B] if B_pad != B else out


def init_params(key):
    """Deterministic init mimicking PyTorch nn.Linear default:
    U(-1/sqrt(fan_in), 1/sqrt(fan_in)) for both weight and bias."""
    def linear_init(k, fan_in, fan_out):
        kw, kb = jax.random.split(k)
        bound = 1.0 / (fan_in ** 0.5)
        w = jax.random.uniform(kw, (fan_in, fan_out), jnp.float32,
                               minval=-bound, maxval=bound)
        b = jax.random.uniform(kb, (1, fan_out), jnp.float32,
                               minval=-bound, maxval=bound)
        return w, b

    k1, k2, k3 = jax.random.split(key, 3)
    w1, b1 = linear_init(k1, 3, 64)
    w2, b2 = linear_init(k2, 64, 64)
    w3, b3 = linear_init(k3, 64, 1)
    return {"w1": w1, "b1": b1, "w2": w2, "b2": b2, "w3": w3, "b3": b3}


if __name__ == "__main__":
    key = jax.random.PRNGKey(0)
    pkey, xkey = jax.random.split(key)

    params = init_params(pkey)

    B = 8  # small batch; state dim is 3 per the module's fc1
    state = jax.random.normal(xkey, (B, 3), dtype=jnp.float32)

    action = pnetwork_forward(state, params)
    action = jax.block_until_ready(action)

    # sanity: shape (B, 1), values bounded in [-2, 2] by tanh*2
    assert action.shape == (B, 1)
    assert bool(jnp.all(jnp.abs(action) <= 2.0))

    # cross-check against full-f32 plain-JAX reference (kernel streams x and
    # holds w2 in bf16, so use a loose-but-safe tolerance)
    h1 = jnp.maximum(state @ params["w1"] + params["b1"], 0.0)
    h2 = jnp.maximum(h1 @ params["w2"] + params["b2"], 0.0)
    ref = jnp.tanh(h2 @ params["w3"] + params["b3"]) * 2.0
    assert bool(jnp.allclose(action, ref, atol=5e-2, rtol=0.0)), (
        float(jnp.max(jnp.abs(action - ref))))

    print("KERNEL_OK")
</pallas_src>

<mosaic_0001>
module attributes {stable_mosaic.version = 11 : i64} {
  func.func @pnetwork_kernel(%arg0: i32, %arg1: memref<16x3xbf16, #tpu.memory_space<vmem>>, %arg2: memref<3x64xf32, #tpu.memory_space<vmem>>, %arg3: memref<1x64xf32, #tpu.memory_space<vmem>>, %arg4: memref<64x64xbf16, #tpu.memory_space<vmem>>, %arg5: memref<1x64xf32, #tpu.memory_space<vmem>>, %arg6: memref<1x64xf32, #tpu.memory_space<vmem>>, %arg7: memref<1x1xf32, #tpu.memory_space<smem>>, %arg8: memref<16x1xf32, #tpu.memory_space<vmem>>) attributes {dimension_semantics = [#tpu.dimension_semantics<parallel>], iteration_bounds = array<i64: 1>, scalar_prefetch = 0 : i64, scratch_operands = 0 : i64, tpu.core_type = #tpu.core_type<tc>, window_params = [{transform_indices = @transform_0, window_bounds = array<i64: 16, 3>}, {pipeline_mode = #tpu.pipeline_mode<synchronous>, transform_indices = @transform_1, window_bounds = array<i64: 3, 64>}, {pipeline_mode = #tpu.pipeline_mode<synchronous>, transform_indices = @transform_2, window_bounds = array<i64: 1, 64>}, {pipeline_mode = #tpu.pipeline_mode<synchronous>, transform_indices = @transform_3, window_bounds = array<i64: 64, 64>}, {pipeline_mode = #tpu.pipeline_mode<synchronous>, transform_indices = @transform_4, window_bounds = array<i64: 1, 64>}, {pipeline_mode = #tpu.pipeline_mode<synchronous>, transform_indices = @transform_5, window_bounds = array<i64: 1, 64>}, {transform_indices = @transform_6, window_bounds = array<i64: 1, 1>}, {transform_indices = @transform_7, window_bounds = array<i64: 16, 1>}]} {
    %c0 = arith.constant 0 : index
    %c0_0 = arith.constant 0 : index
    %0 = vector.load %arg1[%c0, %c0_0] : memref<16x3xbf16, #tpu.memory_space<vmem>>, vector<16x3xbf16>
    %c0_1 = arith.constant 0 : index
    %c0_2 = arith.constant 0 : index
    %1 = vector.load %arg2[%c0_1, %c0_2] : memref<3x64xf32, #tpu.memory_space<vmem>>, vector<3x64xf32>
    %2 = vector.extract_strided_slice %0 {offsets = [0, 0], sizes = [16, 1], strides = [1, 1]} : vector<16x3xbf16> to vector<16x1xbf16>
    %3 = vector.extract_strided_slice %1 {offsets = [0, 0], sizes = [1, 64], strides = [1, 1]} : vector<3x64xf32> to vector<1x64xf32>
    %4 = arith.extf %2 : vector<16x1xbf16> to vector<16x1xf32>
    %5 = vector.broadcast %4 : vector<16x1xf32> to vector<16x64xf32>
    %6 = vector.broadcast %3 : vector<1x64xf32> to vector<16x64xf32>
    %7 = arith.mulf %5, %6 : vector<16x64xf32>
    %8 = vector.extract_strided_slice %0 {offsets = [0, 1], sizes = [16, 1], strides = [1, 1]} : vector<16x3xbf16> to vector<16x1xbf16>
    %9 = vector.extract_strided_slice %1 {offsets = [1, 0], sizes = [1, 64], strides = [1, 1]} : vector<3x64xf32> to vector<1x64xf32>
    %10 = arith.extf %8 : vector<16x1xbf16> to vector<16x1xf32>
    %11 = vector.broadcast %10 : vector<16x1xf32> to vector<16x64xf32>
    %12 = vector.broadcast %9 : vector<1x64xf32> to vector<16x64xf32>
    %13 = arith.mulf %11, %12 : vector<16x64xf32>
    %14 = arith.addf %7, %13 : vector<16x64xf32>
    %15 = vector.extract_strided_slice %0 {offsets = [0, 2], sizes = [16, 1], strides = [1, 1]} : vector<16x3xbf16> to vector<16x1xbf16>
    %16 = vector.extract_strided_slice %1 {offsets = [2, 0], sizes = [1, 64], strides = [1, 1]} : vector<3x64xf32> to vector<1x64xf32>
    %17 = arith.extf %15 : vector<16x1xbf16> to vector<16x1xf32>
    %18 = vector.broadcast %17 : vector<16x1xf32> to vector<16x64xf32>
    %19 = vector.broadcast %16 : vector<1x64xf32> to vector<16x64xf32>
    %20 = arith.mulf %18, %19 : vector<16x64xf32>
    %21 = arith.addf %14, %20 : vector<16x64xf32>
    %c0_3 = arith.constant 0 : index
    %c0_4 = arith.constant 0 : index
    %22 = vector.load %arg3[%c0_3, %c0_4] : memref<1x64xf32, #tpu.memory_space<vmem>>, vector<1x64xf32>
    %23 = vector.broadcast %22 : vector<1x64xf32> to vector<16x64xf32>
    %24 = arith.addf %21, %23 : vector<16x64xf32>
    %cst = arith.constant 0.000000e+00 : f32
    %25 = vector.broadcast %cst : f32 to vector<16x64xf32>
    %26 = arith.maximumf %24, %25 : vector<16x64xf32>
    %27 = arith.truncf %26 : vector<16x64xf32> to vector<16x64xbf16>
    %c0_5 = arith.constant 0 : index
    %c0_6 = arith.constant 0 : index
    %28 = vector.load %arg4[%c0_5, %c0_6] : memref<64x64xbf16, #tpu.memory_space<vmem>>, vector<64x64xbf16>
    %cst_7 = arith.constant dense<0.000000e+00> : vector<16x64xf32>
    %29 = tpu.matmul %27, %28, %cst_7 {dimension_numbers = #tpu.dot_dimension_numbers<[1], [0], [0], [1], [0, 0, 1, 1], [], []>} : vector<16x64xbf16>, vector<64x64xbf16>, vector<16x64xf32> -> vector<16x64xf32>
    %c0_8 = arith.constant 0 : index
    %c0_9 = arith.constant 0 : index
    %30 = vector.load %arg5[%c0_8, %c0_9] : memref<1x64xf32, #tpu.memory_space<vmem>>, vector<1x64xf32>
    %31 = vector.broadcast %30 : vector<1x64xf32> to vector<16x64xf32>
    %32 = arith.addf %29, %31 : vector<16x64xf32>
    %cst_10 = arith.constant 0.000000e+00 : f32
    %33 = vector.broadcast %cst_10 : f32 to vector<16x64xf32>
    %34 = arith.maximumf %32, %33 : vector<16x64xf32>
    %c0_11 = arith.constant 0 : index
    %c0_12 = arith.constant 0 : index
    %35 = vector.load %arg6[%c0_11, %c0_12] : memref<1x64xf32, #tpu.memory_space<vmem>>, vector<1x64xf32>
    %36 = vector.broadcast %35 : vector<1x64xf32> to vector<16x64xf32>
    %37 = arith.mulf %34, %36 : vector<16x64xf32>
    %cst_13 = arith.constant dense<0.000000e+00> : vector<16xf32>
    %38 = vector.multi_reduction <add>, %37, %cst_13 [1] : vector<16x64xf32> to vector<16xf32>
    %39 = vector.shape_cast %38 : vector<16xf32> to vector<16x1xf32>
    %c0_14 = arith.constant 0 : index
    %c0_15 = arith.constant 0 : index
    %40 = memref.load %arg7[%c0_14, %c0_15] : memref<1x1xf32, #tpu.memory_space<smem>>
    %41 = vector.broadcast %40 : f32 to vector<16x1xf32>
    %42 = arith.addf %39, %41 : vector<16x1xf32>
    %43 = math.tanh %42 : vector<16x1xf32>
    %cst_16 = arith.constant 2.000000e+00 : f32
    %44 = vector.broadcast %cst_16 : f32 to vector<16x1xf32>
    %45 = arith.mulf %43, %44 : vector<16x1xf32>
    %c0_17 = arith.constant 0 : index
    %c0_18 = arith.constant 0 : index
    %46 = vector.load %arg8[%c0_17, %c0_18] : memref<16x1xf32, #tpu.memory_space<vmem>>, vector<16x1xf32>
    tpu.vector_store %arg8[%c0_17, %c0_18], %45 {strides = array<i32>} : memref<16x1xf32, #tpu.memory_space<vmem>>, vector<16x1xf32>,
    return
  }
  func.func @transform_0(%arg0: i32) -> (i32, i32) {
    %c0_i32 = arith.constant 0 : i32
    %c0_i32_0 = arith.constant 0 : i32
    return %arg0, %c0_i32 : i32, i32
  }
  func.func @transform_1(%arg0: i32) -> (i32, i32) {
    %c0_i32 = arith.constant 0 : i32
    %c0_i32_0 = arith.constant 0 : i32
    %c0_i32_1 = arith.constant 0 : i32
    return %c0_i32, %c0_i32_0 : i32, i32
  }
  func.func @transform_2(%arg0: i32) -> (i32, i32) {
    %c0_i32 = arith.constant 0 : i32
    %c0_i32_0 = arith.constant 0 : i32
    %c0_i32_1 = arith.constant 0 : i32
    return %c0_i32, %c0_i32_0 : i32, i32
  }
  func.func @transform_3(%arg0: i32) -> (i32, i32) {
    %c0_i32 = arith.constant 0 : i32
    %c0_i32_0 = arith.constant 0 : i32
    %c0_i32_1 = arith.constant 0 : i32
    return %c0_i32, %c0_i32_0 : i32, i32
  }
  func.func @transform_4(%arg0: i32) -> (i32, i32) {
    %c0_i32 = arith.constant 0 : i32
    %c0_i32_0 = arith.constant 0 : i32
    %c0_i32_1 = arith.constant 0 : i32
    return %c0_i32, %c0_i32_0 : i32, i32
  }
  func.func @transform_5(%arg0: i32) -> (i32, i32) {
    %c0_i32 = arith.constant 0 : i32
    %c0_i32_0 = arith.constant 0 : i32
    %c0_i32_1 = arith.constant 0 : i32
    return %c0_i32, %c0_i32_0 : i32, i32
  }
  func.func @transform_6(%arg0: i32) -> (i32, i32) {
    %c0_i32 = arith.constant 0 : i32
    %c0_i32_0 = arith.constant 0 : i32
    %c0_i32_1 = arith.constant 0 : i32
    return %c0_i32, %c0_i32_0 : i32, i32
  }
  func.func @transform_7(%arg0: i32) -> (i32, i32) {
    %c0_i32 = arith.constant 0 : i32
    %c0_i32_0 = arith.constant 0 : i32
    return %arg0, %c0_i32 : i32, i32
  }
}

</mosaic_0001>

<llo_original>
// kernel: tpu_custom_call.1
$region0: #{tpu_custom_call.1}
  #allocation0 [shape = 'u32[]', space=smem, size = 0x4, offset = 0x4, fixed_abs, tag = 'smem constant byte address 0x4 - core index']
  #allocation1 [shape = 'u32[144,128]{1,0:T(1,128)}', space=vmem, size = 0x12000, scoped, tag = 'internal scratch']
  #allocation2 [shape = 'f32[1,1]{1,0:T(1,128)S(6)}', space=smem, size = 0x200, scoped, tag = 'scoped memory for tpu_custom_call.1']
  %s0 = inlined_call_operand.vmem [shape: bf16[16,3], index: 0, kind: input, shape index: {}]
  %s1 = inlined_call_operand.vmem [shape: f32[3,64], index: 1, kind: input, shape index: {}]
  %s2 = inlined_call_operand.vmem [shape: f32[1,64], index: 2, kind: input, shape index: {}]
  %s3 = inlined_call_operand.hbm [shape: bf16[64,64], index: 3, kind: input, shape index: {}]
  %s4 = inlined_call_operand.vmem [shape: f32[1,64], index: 4, kind: input, shape index: {}]
  %s5 = inlined_call_operand.vmem [shape: f32[1,64], index: 5, kind: input, shape index: {}]
  %s6 = inlined_call_operand.<no memory space> [shape: f32[1,1], index: 6, kind: input, shape index: {}]
  %s7 = inlined_call_operand.vmem [shape: f32[16,1], index: 7, kind: output, shape index: {}]
  %s8 = sld [smem:[#allocation0]]
  $region42: #{tpu_custom_call.1} parent=0
    _
  %s10 = ssub.s32 1, %s8
  %s11 = scalar_select 0, %s10, %s8
  %12 = sst [smem:[#allocation2]] %s6
  $region1: #{tpu_custom_call.1} parent=0
    #allocation3 [shape = 'u8[16384]{0}', space=vmem, size = 0x4000, scoped, tag = 'input window, operand 3, single buffered']
    #allocation4 [shape = 's32[1]{0}', space=sflag, size = 0x4, scoped, tag = 'scoped memory for tpu_custom_call.1']
    %13 = vsyncpa [#allocation4], 0
    // Predicated region
    $region2: #{tpu_custom_call.1} parent=1 // pred_check
      _
    $region3: #{tpu_custom_call.1} parent=1 // pred_check_branch
      %15 = sbr.rel (0) target = $region5
    $region4: #{tpu_custom_call.1} parent=1 // pred_region
      _
    $region5: #{tpu_custom_call.1} parent=1 // pred_fallthru
      _
    // Predicated region
    $region6: #{tpu_custom_call.1} parent=1 // pred_check
      _
    $region7: #{tpu_custom_call.1} parent=1 // pred_check_branch
      %17 = sbr.rel (0) target = $region9
    $region8: #{tpu_custom_call.1} parent=1 // pred_region
      _
    $region9: #{tpu_custom_call.1} parent=1 // pred_fallthru
      _
    // Predicated region
    $region10: #{tpu_custom_call.1} parent=1 // pred_check
      _
    $region11: #{tpu_custom_call.1} parent=1 // pred_check_branch
      %19 = sbr.rel (0) target = $region13
    $region12: #{tpu_custom_call.1} parent=1 // pred_region
      _
    $region13: #{tpu_custom_call.1} parent=1 // pred_fallthru
      _
    // Predicated region
    $region14: #{tpu_custom_call.1} parent=1 // pred_check
      _
    $region15: #{tpu_custom_call.1} parent=1 // pred_check_branch
      %21 = sbr.rel (0) target = $region17
    $region16: #{tpu_custom_call.1} parent=1 // pred_region
      %s23 = ssub.s32 512, 512
      %24 = vsyncadd [#allocation4], %s23
      %s25 = sshll.u32 [#allocation3], 4
      %s26 = int_to_ptr.vmem [resolvable:$true] %s25
      %31 = dma.hbm_to_vmem [thread:$0]  %s3, 512, %s26, [#allocation4], 64, 64, 4
    $region17: #{tpu_custom_call.1} parent=1 // pred_fallthru
      _
    // Predicated region
    $region18: #{tpu_custom_call.1} parent=1 // pred_check
      _
    $region19: #{tpu_custom_call.1} parent=1 // pred_check_branch
      %33 = sbr.rel (0) target = $region21
    $region20: #{tpu_custom_call.1} parent=1 // pred_region
      _
    $region21: #{tpu_custom_call.1} parent=1 // pred_fallthru
      _
    // Predicated region
    $region22: #{tpu_custom_call.1} parent=1 // pred_check
      _
    $region23: #{tpu_custom_call.1} parent=1 // pred_check_branch
      %35 = sbr.rel (0) target = $region25
    $region24: #{tpu_custom_call.1} parent=1 // pred_region
      _
    $region25: #{tpu_custom_call.1} parent=1 // pred_fallthru
      _
    // Predicated region
    $region26: #{tpu_custom_call.1} parent=1 // pred_check
      _
    $region27: #{tpu_custom_call.1} parent=1 // pred_check_branch
      %37 = sbr.rel (0) target = $region29
    $region28: #{tpu_custom_call.1} parent=1 // pred_region
      _
    $region29: #{tpu_custom_call.1} parent=1 // pred_fallthru
      _
    // Predicated region
    $region30: #{tpu_custom_call.1} parent=1 // pred_check
      _
    $region31: #{tpu_custom_call.1} parent=1 // pred_check_branch
      %39 = sbr.rel (0) target = $region33
    $region32: #{tpu_custom_call.1} parent=1 // pred_region
      %40 = dma.done [#allocation4], 512
    $region33: #{tpu_custom_call.1} parent=1 // pred_fallthru
      _
    %v42 = vld [vmem:[%s0] sm:$0xf]
    %v43 = vld [vmem:[%s0 + $0x4] sm:$0xf]
    %v44 = vld [vmem:[%s1] sm:$0x7]
    %v45 = vunpack.c.l.bf16 %v42
    %v46 = vunpack.c.l.bf16 %v43
    %48 = vset.pattern.permute.xlu0 0
    %49 = vperm.xlu0 %48, %v45
    %v50 = vpop.permute.xlu0 %49
    %53 = vset.pattern.permute.xlu0 0
    %54 = vperm.xlu0 %53, %v46
    %v55 = vpop.permute.xlu0 %54
    %v57 = vlaneseq
    %v58 = vshrl.u32 %v57, 7
    %v59 = vsub.s32 0, %v58
    %v60 = vrot.slane %v44, %v59
    %v61 = vmul.f32 %v50, %v60
    %v62 = vmul.f32 %v55, %v60
    %63 = vset.pattern.permute.xlu0 1
    %64 = vperm.xlu0 %63, %v45
    %v65 = vpop.permute.xlu0 %64
    %67 = vset.pattern.permute.xlu0 1
    %68 = vperm.xlu0 %67, %v46
    %v69 = vpop.permute.xlu0 %68
    %v71 = vlaneseq
    %v72 = vshrl.u32 %v71, 7
    %v73 = vsub.s32 1, %v72
    %v74 = vrot.slane %v44, %v73
    %v75 = vmul.f32 %v65, %v74
    %v76 = vmul.f32 %v69, %v74
    %v77 = vadd.f32 %v61, %v75
    %v78 = vadd.f32 %v62, %v76
    %79 = vset.pattern.permute.xlu0 2
    %80 = vperm.xlu0 %79, %v45
    %v81 = vpop.permute.xlu0 %80
    %83 = vset.pattern.permute.xlu0 2
    %84 = vperm.xlu0 %83, %v46
    %v85 = vpop.permute.xlu0 %84
    %v87 = vlaneseq
    %v88 = vshrl.u32 %v87, 7
    %v89 = vsub.s32 2, %v88
    %v90 = vrot.slane %v44, %v89
    %v91 = vmul.f32 %v81, %v90
    %v92 = vmul.f32 %v85, %v90
    %v93 = vadd.f32 %v77, %v91
    %v94 = vadd.f32 %v78, %v92
    %v95 = vld [vmem:[%s2] sm:$0x1]
    %v97 = vlaneseq
    %v98 = vshrl.u32 %v97, 7
    %v99 = vsub.s32 0, %v98
    %v100 = vrot.slane %v95, %v99
    %v102 = vadd.f32 %v93, %v100
    %v103 = vadd.f32 %v94, %v100
    %v104 = vmax.f32 %v102, 0.0
    %v105 = vmax.f32 %v103, 0.0
    %v106 = vpack.c.bf16 %v105, %v104
    %v107 = vld [vmem:[#allocation3] sm:$0xf]
    %v108 = vld [vmem:[#allocation3 + $0x4] sm:$0xf]
    %v109 = vld [vmem:[#allocation3 + $0x8] sm:$0xf]
    %v110 = vld [vmem:[#allocation3 + $0xc] sm:$0xf]
    %v111 = vld [vmem:[#allocation3 + $0x10] sm:$0xf]
    %v112 = vld [vmem:[#allocation3 + $0x14] sm:$0xf]
    %v113 = vld [vmem:[#allocation3 + $0x18] sm:$0xf]
    %v114 = vld [vmem:[#allocation3 + $0x1c] sm:$0xf]
    %v115 = vld [vmem:[%s4] sm:$0x1]
    %v117 = vlaneseq
    %v118 = vshrl.u32 %v117, 7
    %v119 = vsub.s32 0, %v118
    %v120 = vrot.slane %v115, %v119
    %v130 = vunpack.c.l.b16 %v107
    %v131 = vunpack.c.l.b16 %v108
    %v132 = vunpack.c.l.b16 %v109
    %v133 = vunpack.c.l.b16 %v110
    %v134 = vunpack.c.l.b16 %v111
    %v135 = vunpack.c.l.b16 %v112
    %v136 = vunpack.c.l.b16 %v113
    %v137 = vunpack.c.l.b16 %v114
    %v138 = vpack.c.b16 %v131, %v130
    %v139 = vpack.c.b16 %v133, %v132
    %v140 = vpack.c.b16 %v135, %v134
    %v141 = vpack.c.b16 %v137, %v136
    %vm146 = vcmask 523264
    %v148 = vsel %vm146, %v106, 0
    %150 = vmatprep.subr.bf16.mxu0 0
    %151 = vmatpush1.bf16.msra.mxu0 %v138
    %152 = vmatprep.subr.bf16.mxu0 0
    %153 = vmatpush1.bf16.msra.mxu0 %v139
    %154 = vmatprep.subr.bf16.mxu0 0
    %155 = vmatpush1.bf16.msra.mxu0 %v140
    %156 = vmatprep.subr.bf16.mxu0 0
    %157 = vmatpush1.bf16.msra.mxu0 %v141
    %158 = vmatprep.subr.bf16.mxu0 0
    %159 = vmatpush1.bf16.msra.mxu0 0
    %160 = vmatprep.subr.bf16.mxu0 0
    %161 = vmatpush1.bf16.msra.mxu0 0
    %162 = vmatprep.subr.bf16.mxu0 0
    %163 = vmatpush1.bf16.msra.mxu0 0
    %164 = vmatprep.subr.bf16.mxu0 0
    %165 = vmatpush1.bf16.msra.mxu0 0
    %166 = vmatprep.subr.bf16.mxu0 0
    %167 = vmatpush1.bf16.msra.mxu0 0
    %168 = vmatprep.subr.bf16.mxu0 0
    %169 = vmatpush1.bf16.msra.mxu0 0
    %170 = vmatprep.subr.bf16.mxu0 0
    %171 = vmatpush1.bf16.msra.mxu0 0
    %172 = vmatprep.subr.bf16.mxu0 0
    %173 = vmatpush1.bf16.msra.mxu0 0
    %174 = vmatprep.subr.bf16.mxu0 0
    %175 = vmatpush1.bf16.msra.mxu0 0
    %176 = vmatprep.subr.bf16.mxu0 0
    %177 = vmatpush1.bf16.msra.mxu0 0
    %178 = vmatprep.subr.bf16.mxu0 0
    %179 = vmatpush1.bf16.msra.mxu0 0
    %180 = vmatprep.subr.bf16.mxu0 0
    %181 = vmatpush1.bf16.msra.mxu0 0
    %182 = vmatprep.mubr.bf16.mxu0 0
    %183 = vmatmul.mubr.bf16.gmra.mrb[0].mxu0 %v148
    %v184 = vpop.f32.mrb[0].mxu0
    %v185 = vadd.f32 %v120, %v184
    %v186 = vpop.f32.mrb[0].mxu0
    %v187 = vpop.f32.mrb[0].mxu0
    %v188 = vadd.f32 %v120, %v187
    %v189 = vpop.f32.mrb[0].mxu0
    %190 = vdwg.mxu0
    %v191 = vmax.f32 %v185, 0.0
    %v192 = vmax.f32 %v188, 0.0
    %v193 = vld [vmem:[%s5] sm:$0x1]
    %v195 = vlaneseq
    %v196 = vshrl.u32 %v195, 7
    %v197 = vsub.s32 0, %v196
    %v198 = vrot.slane %v193, %v197
    %v200 = vmul.f32 %v191, %v198
    %v201 = vmul.f32 %v192, %v198
    %v202 = vsel %vm146, %v200, 0.0
    %203 = vadd.xlane.f32.xlu0 %v202
    %v204 = vpop.xlane.xlu0 %203
    %v205 = vsel %vm146, %v201, 0.0
    %206 = vadd.xlane.f32.xlu0 %v205
    %v207 = vpop.xlane.xlu0 %206
    %s208 = sld [smem:[#allocation2]]
    %v209 = vstv %s208
    %v210 = vadd.f32 %v204, %v209
    %v211 = vadd.f32 %v207, %v209
    %v212 = vtanh.pop %v210
    %v213 = vtanh.pop %v211
    %v214 = vmul.f32 %v212, 2.0
    %v215 = vmul.f32 %v213, 2.0
    %vm216 = vcmask 7168
    %217 = vst.msk [vmem:[%s7] sm:$0xff] %vm216, %v214
    %218 = vst.msk [vmem:[%s7 + $0x8] sm:$0xff] %vm216, %v215
    // Predicated region
    $region34: #{tpu_custom_call.1} parent=1 // pred_check
      _
    $region35: #{tpu_custom_call.1} parent=1 // pred_check_branch
      %220 = sbr.rel (0) target = $region37
    $region36: #{tpu_custom_call.1} parent=1 // pred_region
      _
    $region37: #{tpu_custom_call.1} parent=1 // pred_fallthru
      _
    // Predicated region
    $region38: #{tpu_custom_call.1} parent=1 // pred_check
      _
    $region39: #{tpu_custom_call.1} parent=1 // pred_check_branch
      %222 = sbr.rel (0) target = $region41
    $region40: #{tpu_custom_call.1} parent=1 // pred_region
      _
    $region41: #{tpu_custom_call.1} parent=1 // pred_fallthru
      _
    %223 = vsyncpa [#allocation4], 1

</llo_original>
